<compile_context>
chip_gen: v5e
topology: v5e:2x2
jax: 0.10.0
libtpu: 0.0.40
codegen_flags: <defaults>
</compile_context>

<pallas_src>
import functools

import jax
import jax.numpy as jnp
from jax.experimental import pallas as pl
from jax.experimental.pallas import tpu as pltpu

EPS = 1e-5        # PyTorch BatchNorm1d default eps
HIDDEN = 50       # RespiratoryRegression hidden width
OUT_PAD = 128     # lane-dense output width (sliced back to n_reg in the wrapper)


# --------------------------------------------------------------------------------------
# Fused Pallas kernel: conv extractors + folded-BN regressor heads, all in one pass
# --------------------------------------------------------------------------------------
def _fused_forward_kernel(x_ref, feat_ref, cw_ref, st_ref, w1_ref, w2_ref, o_ref,
                          *, K, L_out, n_reg, Du, hidden):
    """x_ref:(bb,L,IC) feat:(bb,F) cw:(K+1,IC) st:(2,n_reg*Du)
       w1:(n_reg*Du+1, n_reg*H) w2:(n_reg*H+1, OUT_PAD) o:(bb,OUT_PAD)."""
    x = x_ref[...]                                               # (bb, L, IC)

    # ---- all feature extractors fused: K shifted FMAs, ReLU, global-average-pool ----
    acc = x[:, 0:L_out, :] * cw_ref[0:1, :]                      # (bb, L_out, IC)
    for k in range(1, K):
        acc = acc + x[:, k:k + L_out, :] * cw_ref[k:k + 1, :]
    act = jnp.maximum(acc + cw_ref[K:K + 1, :], 0.0)             # + bias row, ReLU
    concat = jnp.sum(act, axis=1) * (1.0 / L_out)                # (bb, IC): GAP, already in concat lane order

    # ---- regressor heads (folded BN), consolidated across heads -----------------------
    u = jnp.concatenate([concat, feat_ref[...]], axis=-1)        # (bb, Du) = [concat | feature]
    a = jnp.concatenate([u] * n_reg, axis=-1)                    # (bb, n_reg*Du): one copy per head
    a = jnp.maximum(a * st_ref[0:1, :] + st_ref[1:2, :], 0.0)    # folded BN1 + ReLU (pad cols stay 0)

    nd = n_reg * Du
    h = jnp.dot(a, w1_ref[0:nd, :],
                preferred_element_type=jnp.float32) + w1_ref[nd:nd + 1, :]   # fc1 (+folded BN2)
    h = jnp.maximum(h, 0.0)                                      # (bb, n_reg*hidden)

    nh = n_reg * hidden
    y = jnp.dot(h, w2_ref[0:nh, :],
                preferred_element_type=jnp.float32) + w2_ref[nh:nh + 1, :]   # fc2 for all heads
    o_ref[...] = jnp.maximum(y, 0.0)                             # lane-dense (bb, 128) store


# --------------------------------------------------------------------------------------
# Host-side, one-time parameter packing (BN folding + block-diagonal slabs)
# --------------------------------------------------------------------------------------
def pack_resp_multiverse_params(params, tp):
    input_names = list(tp['input_names'])
    n_in = len(input_names)
    Cn = int(tp['channel_n'])
    K = int(tp['kernel_size'])
    F = len(tp['feature_names'])
    IC = n_in * Cn
    Du = IC + F
    H = HIDDEN
    main_task = tp['output_names'][0]
    reg_names = list(params['regressors'].keys())
    n_reg = len(reg_names)

    # conv slab: rows 0..K-1 = weights, row K = bias; lane block i = extractor of input i
    cw = jnp.zeros((K + 1, IC), jnp.float32)
    for i, name in enumerate(input_names):
        fe = params['feature_extractors'][name]
        cw = cw.at[:K, i * Cn:(i + 1) * Cn].set(fe['w'].astype(jnp.float32))
        cw = cw.at[K, i * Cn:(i + 1) * Cn].set(fe['b'][0].astype(jnp.float32))

    S = jnp.zeros((n_reg * Du,), jnp.float32)
    T = jnp.zeros((n_reg * Du,), jnp.float32)
    W1 = jnp.zeros((n_reg * Du + 1, n_reg * H), jnp.float32)     # last row = folded fc1 bias
    W2 = jnp.zeros((n_reg * H + 1, OUT_PAD), jnp.float32)        # last row = fc2 bias

    for r, rname in enumerate(reg_names):
        rp = params['regressors'][rname]
        # exact-name routing (fixes the substring-match hazard of the original module)
        if rname == main_task:
            cols = jnp.arange(Du)
        else:
            i = input_names.index(rname.split('-')[-1])
            cols = jnp.concatenate([jnp.arange(i * Cn, (i + 1) * Cn),
                                    jnp.arange(IC, IC + F)])

        s1 = rp['bn1_g'][0] * jax.lax.rsqrt(rp['bn1_v'][0] + EPS)
        t1 = rp['bn1_b'][0] - rp['bn1_m'][0] * s1
        s2 = rp['bn2_g'][0] * jax.lax.rsqrt(rp['bn2_v'][0] + EPS)
        t2 = rp['bn2_b'][0] - rp['bn2_m'][0] * s2
        w1f = rp['w1'] * s2[None, :]                              # BN2 folded into fc1 columns
        b1f = rp['b1'][0] * s2 + t2

        base = r * Du
        S = S.at[base:base + Du].set(jnp.zeros((Du,), jnp.float32).at[cols].set(s1))
        T = T.at[base:base + Du].set(jnp.zeros((Du,), jnp.float32).at[cols].set(t1))
        W1 = W1.at[base:base + Du, r * H:(r + 1) * H].set(
            jnp.zeros((Du, H), jnp.float32).at[cols].set(w1f))
        W1 = W1.at[n_reg * Du, r * H:(r + 1) * H].set(b1f)
        W2 = W2.at[r * H:(r + 1) * H, r].set(rp['w2'][0])
        W2 = W2.at[n_reg * H, r].set(rp['b2'][0, 0])

    return {
        'conv_wb': cw,
        'scale_shift': jnp.stack([S, T]),
        'w1_big': W1,
        'w2_big': W2,
        'meta': dict(reg_names=tuple(reg_names), Cn=Cn, K=K, F=F, IC=IC, Du=Du,
                     H=H, n_reg=n_reg, n_in=n_in),
    }


# --------------------------------------------------------------------------------------
# Forward wrapper (single pallas_call, batch-gridded)
# --------------------------------------------------------------------------------------
def resp_multiverse_forward(packed, x, feature):
    meta = packed['meta']
    Cn, K, F = meta['Cn'], meta['K'], meta['F']
    IC, Du, H, n_reg = meta['IC'], meta['Du'], meta['H'], meta['n_reg']
    reg_names = meta['reg_names']

    if feature.ndim == 3:
        feature = feature[:, :, 0]
    x = x.astype(jnp.float32)
    feature = feature.astype(jnp.float32)
    B, _, L = x.shape
    L_out = L - K + 1

    # Wrapper-side layout plumbing: (B, C, L) -> (B, L, n_in*Cn) so the in-kernel conv
    # needs no lane relayouts and the GAP lands directly in concat lane order.
    x_lanes = jnp.repeat(jnp.swapaxes(x, 1, 2), Cn, axis=2)

    # Batch grid: full block at small B; 256-row blocks (8-divisible) when B allows.
    bb = 256 if (B > 256 and B % 256 == 0) else B
    grid = (B // bb,)

    kernel = functools.partial(_fused_forward_kernel, K=K, L_out=L_out,
                               n_reg=n_reg, Du=Du, hidden=H)

    out_padded = pl.pallas_call(
        kernel,
        grid=grid,
        in_specs=[
            pl.BlockSpec((bb, L, IC), lambda i: (i, 0, 0)),
            pl.BlockSpec((bb, F), lambda i: (i, 0)),
            pl.BlockSpec((K + 1, IC), lambda i: (0, 0)),
            pl.BlockSpec((2, n_reg * Du), lambda i: (0, 0)),
            pl.BlockSpec((n_reg * Du + 1, n_reg * H), lambda i: (0, 0)),
            pl.BlockSpec((n_reg * H + 1, OUT_PAD), lambda i: (0, 0)),
        ],
        out_specs=pl.BlockSpec((bb, OUT_PAD), lambda i: (i, 0)),
        out_shape=jax.ShapeDtypeStruct((B, OUT_PAD), jnp.float32),
        compiler_params=pltpu.CompilerParams(dimension_semantics=("parallel",)),
    )(x_lanes, feature, packed['conv_wb'], packed['scale_shift'],
      packed['w1_big'], packed['w2_big'])

    return {name: out_padded[:, r:r + 1] for r, name in enumerate(reg_names)}


# --------------------------------------------------------------------------------------
# Deterministic raw-parameter construction (mirrors resp_multiverse.__init__ shapes)
# --------------------------------------------------------------------------------------
def _normal(key, shape, scale=0.1):
    return scale * jax.random.normal(key, shape, dtype=jnp.float32)


def _init_regressor(key, input_dim, feature_dim, n_classes=1, hidden=HIDDEN):
    assert n_classes == 1, "module fixes n_classes=1"
    D = input_dim + feature_dim
    ks = jax.random.split(key, 12)
    return {
        'bn1_g': 1.0 + _normal(ks[0], (1, D)),
        'bn1_b': _normal(ks[1], (1, D)),
        'bn1_m': _normal(ks[2], (1, D)),
        'bn1_v': 1.0 + jnp.abs(_normal(ks[3], (1, D))),
        'w1':    _normal(ks[4], (D, hidden)),           # Linear(D, 50) weight, pre-transposed
        'b1':    _normal(ks[5], (1, hidden)),
        'bn2_g': 1.0 + _normal(ks[6], (1, hidden)),
        'bn2_b': _normal(ks[7], (1, hidden)),
        'bn2_m': _normal(ks[8], (1, hidden)),
        'bn2_v': 1.0 + jnp.abs(_normal(ks[9], (1, hidden))),
        'w2':    _normal(ks[10], (n_classes, hidden)),  # Linear(50, 1) weight
        'b2':    _normal(ks[11], (1, n_classes)),
    }


def init_resp_multiverse(key, tp):
    channel_n = tp['channel_n']
    K = tp['kernel_size']
    n_features = len(tp['feature_names'])
    assert tp['fusion_type'] == 'late', "demo implements late fusion"

    params = {'feature_extractors': {}, 'regressors': {}}
    for name in tp['input_names']:
        key, kw, kb = jax.random.split(key, 3)
        params['feature_extractors'][name] = {
            'w': _normal(kw, (K, channel_n)),   # Conv1d(1, Cn, K) weight as (K, Cn)
            'b': _normal(kb, (1, channel_n)),
        }

    feature_out_dim = channel_n * len(tp['input_names'])
    main_task = tp['output_names'][0]
    for task in tp['output_names']:
        if task != main_task:
            for name in tp['input_names']:
                key, kr = jax.random.split(key)
                params['regressors'][task + '-' + name] = _init_regressor(
                    kr, channel_n, n_features)
    key, kr = jax.random.split(key)
    params['regressors'][main_task] = _init_regressor(kr, feature_out_dim, n_features)
    return params


# --------------------------------------------------------------------------------------
# Pure-JAX reference (raw, unfolded params) for correctness checks
# --------------------------------------------------------------------------------------
def _ref_forward(params, tp, x, feature):
    if feature.ndim == 3:
        feature = feature[:, :, 0]
    main_task = tp['output_names'][0]

    def fe_ref(x2d, w_kc, b):
        B, L = x2d.shape
        K, Cn = w_kc.shape
        L_out = L - K + 1
        idx = jnp.arange(L_out)[:, None] + jnp.arange(K)[None, :]
        patches = x2d[:, idx]                                   # (B, L_out, K)
        conv = jnp.einsum('blk,kc->blc', patches, w_kc) + b[None, :, :]
        return jnp.mean(jnp.maximum(conv, 0.0), axis=1)

    def reg_ref(z, p):
        h = (z - p['bn1_m']) * jax.lax.rsqrt(p['bn1_v'] + EPS) * p['bn1_g'] + p['bn1_b']
        h = jnp.maximum(h, 0.0)
        h = h @ p['w1'] + p['b1']
        h = (h - p['bn2_m']) * jax.lax.rsqrt(p['bn2_v'] + EPS) * p['bn2_g'] + p['bn2_b']
        h = jnp.maximum(h, 0.0)
        return jnp.maximum(h @ p['w2'].T + p['b2'], 0.0)

    fo, cat = {}, []
    for i, name in enumerate(tp['input_names']):
        fe = params['feature_extractors'][name]
        v = fe_ref(x[:, i, :], fe['w'], fe['b'])
        fo[name] = v
        cat.append(v)
    fo['concat'] = jnp.concatenate(cat, axis=-1)

    out = {}
    for rname, rp in params['regressors'].items():
        # exact-name routing (same fix as the packed path)
        z = fo['concat'] if rname == main_task else fo[rname.split('-')[-1]]
        out[rname] = reg_ref(jnp.concatenate([z, feature], axis=1), rp)
    return out


# --------------------------------------------------------------------------------------
if __name__ == "__main__":
    training_params = {
        'data_dimensions': [2, 16],            # (input_channel, input_dim=L)
        'input_names': ['ppg', 'ecg'],
        'channel_n': 8,
        'kernel_size': 3,
        'feature_names': ['f0', 'f1', 'f2'],
        'output_names': ['RR', 'HR'],          # main task first
        'fusion_type': 'late',
        'model_name': 'FeatureExtractor_CNN',
    }

    key = jax.random.PRNGKey(0)
    kp, kx, kf = jax.random.split(key, 3)
    params = init_resp_multiverse(kp, training_params)
    packed = pack_resp_multiverse_params(params, training_params)   # one-time host cost

    B = 2
    x = jax.random.normal(kx, (B, 2, 16), dtype=jnp.float32)        # (B, C, L)
    feature = jax.random.normal(kf, (B, 3), dtype=jnp.float32)      # engineered features

    out = resp_multiverse_forward(packed, x, feature)
    out = jax.tree_util.tree_map(jax.block_until_ready, out)

    ref = _ref_forward(params, training_params, x, feature)
    for k in out:
        assert out[k].shape == (B, 1), (k, out[k].shape)
        assert jnp.allclose(out[k], ref[k], rtol=1e-3, atol=1e-4), (k, out[k], ref[k])

    print("KERNEL_OK")
</pallas_src>

<mosaic_0001>
module attributes {stable_mosaic.version = 11 : i64} {
  func.func @_fused_forward_kernel(%arg0: i32, %arg1: memref<2x16x16xf32, #tpu.memory_space<vmem>>, %arg2: memref<2x3xf32, #tpu.memory_space<vmem>>, %arg3: memref<4x16xf32, #tpu.memory_space<vmem>>, %arg4: memref<2x57xf32, #tpu.memory_space<vmem>>, %arg5: memref<58x150xf32, #tpu.memory_space<vmem>>, %arg6: memref<151x128xf32, #tpu.memory_space<vmem>>, %arg7: memref<2x128xf32, #tpu.memory_space<vmem>>) attributes {dimension_semantics = [#tpu.dimension_semantics<parallel>], iteration_bounds = array<i64: 1>, scalar_prefetch = 0 : i64, scratch_operands = 0 : i64, tpu.core_type = #tpu.core_type<tc>, window_params = [{transform_indices = @transform_0, window_bounds = array<i64: 2, 16, 16>}, {transform_indices = @transform_1, window_bounds = array<i64: 2, 3>}, {pipeline_mode = #tpu.pipeline_mode<synchronous>, transform_indices = @transform_2, window_bounds = array<i64: 4, 16>}, {pipeline_mode = #tpu.pipeline_mode<synchronous>, transform_indices = @transform_3, window_bounds = array<i64: 2, 57>}, {pipeline_mode = #tpu.pipeline_mode<synchronous>, transform_indices = @transform_4, window_bounds = array<i64: 58, 150>}, {pipeline_mode = #tpu.pipeline_mode<synchronous>, transform_indices = @transform_5, window_bounds = array<i64: 151, 128>}, {transform_indices = @transform_6, window_bounds = array<i64: 2, 128>}]} {
    %c0 = arith.constant 0 : index
    %c0_0 = arith.constant 0 : index
    %c0_1 = arith.constant 0 : index
    %0 = vector.load %arg1[%c0, %c0_0, %c0_1] : memref<2x16x16xf32, #tpu.memory_space<vmem>>, vector<2x16x16xf32>
    %1 = vector.extract_strided_slice %0 {offsets = [0, 0, 0], sizes = [2, 14, 16], strides = [1, 1, 1]} : vector<2x16x16xf32> to vector<2x14x16xf32>
    %c0_2 = arith.constant 0 : index
    %c0_3 = arith.constant 0 : index
    %2 = vector.load %arg3[%c0_2, %c0_3] : memref<4x16xf32, #tpu.memory_space<vmem>>, vector<1x16xf32>
    %3 = vector.shape_cast %2 : vector<1x16xf32> to vector<1x1x16xf32>
    %4 = vector.broadcast %3 : vector<1x1x16xf32> to vector<2x14x16xf32>
    %5 = arith.mulf %1, %4 : vector<2x14x16xf32>
    %6 = vector.extract_strided_slice %0 {offsets = [0, 1, 0], sizes = [2, 14, 16], strides = [1, 1, 1]} : vector<2x16x16xf32> to vector<2x14x16xf32>
    %c1 = arith.constant 1 : index
    %c0_4 = arith.constant 0 : index
    %7 = vector.load %arg3[%c1, %c0_4] : memref<4x16xf32, #tpu.memory_space<vmem>>, vector<1x16xf32>
    %8 = vector.shape_cast %7 : vector<1x16xf32> to vector<1x1x16xf32>
    %9 = vector.broadcast %8 : vector<1x1x16xf32> to vector<2x14x16xf32>
    %10 = arith.mulf %6, %9 : vector<2x14x16xf32>
    %11 = arith.addf %5, %10 : vector<2x14x16xf32>
    %12 = vector.extract_strided_slice %0 {offsets = [0, 2, 0], sizes = [2, 14, 16], strides = [1, 1, 1]} : vector<2x16x16xf32> to vector<2x14x16xf32>
    %c2 = arith.constant 2 : index
    %c0_5 = arith.constant 0 : index
    %13 = vector.load %arg3[%c2, %c0_5] : memref<4x16xf32, #tpu.memory_space<vmem>>, vector<1x16xf32>
    %14 = vector.shape_cast %13 : vector<1x16xf32> to vector<1x1x16xf32>
    %15 = vector.broadcast %14 : vector<1x1x16xf32> to vector<2x14x16xf32>
    %16 = arith.mulf %12, %15 : vector<2x14x16xf32>
    %17 = arith.addf %11, %16 : vector<2x14x16xf32>
    %c3 = arith.constant 3 : index
    %c0_6 = arith.constant 0 : index
    %18 = vector.load %arg3[%c3, %c0_6] : memref<4x16xf32, #tpu.memory_space<vmem>>, vector<1x16xf32>
    %19 = vector.shape_cast %18 : vector<1x16xf32> to vector<1x1x16xf32>
    %20 = vector.broadcast %19 : vector<1x1x16xf32> to vector<2x14x16xf32>
    %21 = arith.addf %17, %20 : vector<2x14x16xf32>
    %cst = arith.constant 0.000000e+00 : f32
    %22 = vector.broadcast %cst : f32 to vector<2x14x16xf32>
    %23 = arith.maximumf %21, %22 : vector<2x14x16xf32>
    %cst_7 = arith.constant dense<0.000000e+00> : vector<2x16xf32>
    %24 = vector.multi_reduction <add>, %23, %cst_7 [1] : vector<2x14x16xf32> to vector<2x16xf32>
    %cst_8 = arith.constant 0.0714285746 : f32
    %25 = vector.broadcast %cst_8 : f32 to vector<2x16xf32>
    %26 = arith.mulf %24, %25 : vector<2x16xf32>
    %c0_9 = arith.constant 0 : index
    %c0_10 = arith.constant 0 : index
    %27 = vector.load %arg2[%c0_9, %c0_10] : memref<2x3xf32, #tpu.memory_space<vmem>>, vector<2x3xf32>
    %28 = tpu.concatenate %26, %27 in 1 : vector<2x16xf32>, vector<2x3xf32> -> vector<2x19xf32>
    %29 = tpu.concatenate %28, %28, %28 in 1 : vector<2x19xf32>, vector<2x19xf32>, vector<2x19xf32> -> vector<2x57xf32>
    %c0_11 = arith.constant 0 : index
    %c0_12 = arith.constant 0 : index
    %30 = vector.load %arg4[%c0_11, %c0_12] : memref<2x57xf32, #tpu.memory_space<vmem>>, vector<1x57xf32>
    %31 = vector.broadcast %30 : vector<1x57xf32> to vector<2x57xf32>
    %32 = arith.mulf %29, %31 : vector<2x57xf32>
    %c1_13 = arith.constant 1 : index
    %c0_14 = arith.constant 0 : index
    %33 = vector.load %arg4[%c1_13, %c0_14] : memref<2x57xf32, #tpu.memory_space<vmem>>, vector<1x57xf32>
    %34 = vector.broadcast %33 : vector<1x57xf32> to vector<2x57xf32>
    %35 = arith.addf %32, %34 : vector<2x57xf32>
    %cst_15 = arith.constant 0.000000e+00 : f32
    %36 = vector.broadcast %cst_15 : f32 to vector<2x57xf32>
    %37 = arith.maximumf %35, %36 : vector<2x57xf32>
    %c0_16 = arith.constant 0 : index
    %c0_17 = arith.constant 0 : index
    %38 = vector.load %arg5[%c0_16, %c0_17] : memref<58x150xf32, #tpu.memory_space<vmem>>, vector<57x150xf32>
    %cst_18 = arith.constant dense<0.000000e+00> : vector<2x150xf32>
    %39 = tpu.matmul %37, %38, %cst_18 {dimension_numbers = #tpu.dot_dimension_numbers<[1], [0], [0], [1], [0, 0, 1, 1], [], []>} : vector<2x57xf32>, vector<57x150xf32>, vector<2x150xf32> -> vector<2x150xf32>
    %c57 = arith.constant 57 : index
    %c0_19 = arith.constant 0 : index
    %40 = vector.load %arg5[%c57, %c0_19] : memref<58x150xf32, #tpu.memory_space<vmem>>, vector<1x150xf32>
    %41 = vector.broadcast %40 : vector<1x150xf32> to vector<2x150xf32>
    %42 = arith.addf %39, %41 : vector<2x150xf32>
    %cst_20 = arith.constant 0.000000e+00 : f32
    %43 = vector.broadcast %cst_20 : f32 to vector<2x150xf32>
    %44 = arith.maximumf %42, %43 : vector<2x150xf32>
    %c0_21 = arith.constant 0 : index
    %c0_22 = arith.constant 0 : index
    %45 = vector.load %arg6[%c0_21, %c0_22] : memref<151x128xf32, #tpu.memory_space<vmem>>, vector<150x128xf32>
    %cst_23 = arith.constant dense<0.000000e+00> : vector<2x128xf32>
    %46 = tpu.matmul %44, %45, %cst_23 {dimension_numbers = #tpu.dot_dimension_numbers<[1], [0], [0], [1], [0, 0, 1, 1], [], []>} : vector<2x150xf32>, vector<150x128xf32>, vector<2x128xf32> -> vector<2x128xf32>
    %c150 = arith.constant 150 : index
    %c0_24 = arith.constant 0 : index
    %47 = vector.load %arg6[%c150, %c0_24] : memref<151x128xf32, #tpu.memory_space<vmem>>, vector<1x128xf32>
    %48 = vector.broadcast %47 : vector<1x128xf32> to vector<2x128xf32>
    %49 = arith.addf %46, %48 : vector<2x128xf32>
    %cst_25 = arith.constant 0.000000e+00 : f32
    %50 = vector.broadcast %cst_25 : f32 to vector<2x128xf32>
    %51 = arith.maximumf %49, %50 : vector<2x128xf32>
    %c0_26 = arith.constant 0 : index
    %c0_27 = arith.constant 0 : index
    %52 = vector.load %arg7[%c0_26, %c0_27] : memref<2x128xf32, #tpu.memory_space<vmem>>, vector<2x128xf32>
    tpu.vector_store %arg7[%c0_26, %c0_27], %51 {strides = array<i32>} : memref<2x128xf32, #tpu.memory_space<vmem>>, vector<2x128xf32>,
    return
  }
  func.func @transform_0(%arg0: i32) -> (i32, i32, i32) {
    %c0_i32 = arith.constant 0 : i32
    %c0_i32_0 = arith.constant 0 : i32
    %c0_i32_1 = arith.constant 0 : i32
    return %arg0, %c0_i32, %c0_i32_0 : i32, i32, i32
  }
  func.func @transform_1(%arg0: i32) -> (i32, i32) {
    %c0_i32 = arith.constant 0 : i32
    %c0_i32_0 = arith.constant 0 : i32
    return %arg0, %c0_i32 : i32, i32
  }
  func.func @transform_2(%arg0: i32) -> (i32, i32) {
    %c0_i32 = arith.constant 0 : i32
    %c0_i32_0 = arith.constant 0 : i32
    %c0_i32_1 = arith.constant 0 : i32
    return %c0_i32, %c0_i32_0 : i32, i32
  }
  func.func @transform_3(%arg0: i32) -> (i32, i32) {
    %c0_i32 = arith.constant 0 : i32
    %c0_i32_0 = arith.constant 0 : i32
    %c0_i32_1 = arith.constant 0 : i32
    return %c0_i32, %c0_i32_0 : i32, i32
  }
  func.func @transform_4(%arg0: i32) -> (i32, i32) {
    %c0_i32 = arith.constant 0 : i32
    %c0_i32_0 = arith.constant 0 : i32
    %c0_i32_1 = arith.constant 0 : i32
    return %c0_i32, %c0_i32_0 : i32, i32
  }
  func.func @transform_5(%arg0: i32) -> (i32, i32) {
    %c0_i32 = arith.constant 0 : i32
    %c0_i32_0 = arith.constant 0 : i32
    %c0_i32_1 = arith.constant 0 : i32
    return %c0_i32, %c0_i32_0 : i32, i32
  }
  func.func @transform_6(%arg0: i32) -> (i32, i32) {
    %c0_i32 = arith.constant 0 : i32
    %c0_i32_0 = arith.constant 0 : i32
    return %arg0, %c0_i32 : i32, i32
  }
}

</mosaic_0001>

<llo_original>
// kernel: tpu_custom_call.1
$region0: #{tpu_custom_call.1}
  #allocation0 [shape = 'u32[]', space=smem, size = 0x4, offset = 0x4, fixed_abs, tag = 'smem constant byte address 0x4 - core index']
  #allocation1 [shape = 'u32[72,128]{1,0:T(1,128)}', space=vmem, size = 0x9000, scoped, tag = 'internal scratch']
  %s0 = inlined_call_operand.hbm [shape: f32[2,16,16], index: 0, kind: input, shape index: {}]
  %s1 = inlined_call_operand.hbm [shape: f32[2,3], index: 1, kind: input, shape index: {}]
  %s2 = inlined_call_operand.hbm [shape: f32[4,16], index: 2, kind: input, shape index: {}]
  %s3 = inlined_call_operand.vmem [shape: f32[2,57], index: 3, kind: input, shape index: {}]
  %s4 = inlined_call_operand.hbm [shape: f32[58,150], index: 4, kind: input, shape index: {}]
  %s5 = inlined_call_operand.hbm [shape: f32[151,128], index: 5, kind: input, shape index: {}]
  %s6 = inlined_call_operand.hbm [shape: f32[2,128], index: 6, kind: output, shape index: {}]
  %s7 = sld [smem:[#allocation0]]
  $region54: #{tpu_custom_call.1} parent=0
    _
  %s9 = ssub.s32 1, %s7
  %s10 = scalar_select 0, %s9, %s7
  $region1: #{tpu_custom_call.1} parent=0
    #allocation2 [shape = 'u8[16384]{0}', space=vmem, size = 0x4000, scoped, tag = 'input window, operand 0, single buffered']
    #allocation3 [shape = 's32[1]{0}', space=sflag, size = 0x4, scoped, tag = 'scoped memory for tpu_custom_call.1']
    #allocation4 [shape = 's32[1]{0}', space=sflag, size = 0x4, scoped, tag = 'scoped memory for tpu_custom_call.1']
    #allocation5 [shape = 'u8[1024]{0}', space=vmem, size = 0x400, scoped, tag = 'input window, operand 1, single buffered']
    #allocation6 [shape = 's32[1]{0}', space=sflag, size = 0x4, scoped, tag = 'scoped memory for tpu_custom_call.1']
    #allocation7 [shape = 'u8[2048]{0}', space=vmem, size = 0x800, scoped, tag = 'input window, operand 2, single buffered']
    #allocation8 [shape = 'u8[65536]{0}', space=vmem, size = 0x10000, scoped, tag = 'input window, operand 4, single buffered']
    #allocation9 [shape = 's32[1]{0}', space=sflag, size = 0x4, scoped, tag = 'scoped memory for tpu_custom_call.1']
    #allocation10 [shape = 'u8[77824]{0}', space=vmem, size = 0x13000, scoped, tag = 'input window, operand 5, single buffered']
    #allocation11 [shape = 'u8[1024]{0}', space=vmem, size = 0x400, scoped, tag = 'output window, operand 0, single buffered']
    %11 = vsyncpa [#allocation3], 0
    %12 = vsyncpa [#allocation6], 0
    %13 = vsyncpa [#allocation9], 0
    %14 = vsyncpa [#allocation4], 0
    // Predicated region
    $region2: #{tpu_custom_call.1} parent=1 // pred_check
      _
    $region3: #{tpu_custom_call.1} parent=1 // pred_check_branch
      %16 = sbr.rel (0) target = $region5
    $region4: #{tpu_custom_call.1} parent=1 // pred_region
      %18 = vsyncadd [#allocation3], 0
      %s19 = sshll.u32 %s0, 4
      %s20 = int_to_ptr.hbm [resolvable:$true] %s19
      %s21 = sshll.u32 [#allocation2], 4
      %s22 = int_to_ptr.vmem [resolvable:$true] %s21
      %27 = dma.hbm_to_vmem [thread:$0]  %s20, 512, %s22, [#allocation3], 128, 128, 8
    $region5: #{tpu_custom_call.1} parent=1 // pred_fallthru
      _
    // Predicated region
    $region6: #{tpu_custom_call.1} parent=1 // pred_check
      _
    $region7: #{tpu_custom_call.1} parent=1 // pred_check_branch
      %29 = sbr.rel (0) target = $region9
    $region8: #{tpu_custom_call.1} parent=1 // pred_region
      %31 = vsyncadd [#allocation6], 0
      %s33 = sshll.u32 %s1, 4
      %s34 = int_to_ptr.hbm [resolvable:$true] %s33
      %s35 = sshll.u32 [#allocation5], 4
      %s36 = int_to_ptr.vmem [resolvable:$true] %s35
      %38 = dma.hbm_to_vmem [thread:$0]  %s34, 32, %s36, [#allocation6]
    $region9: #{tpu_custom_call.1} parent=1 // pred_fallthru
      _
    // Predicated region
    $region10: #{tpu_custom_call.1} parent=1 // pred_check
      _
    $region11: #{tpu_custom_call.1} parent=1 // pred_check_branch
      %40 = sbr.rel (0) target = $region13
    $region12: #{tpu_custom_call.1} parent=1 // pred_region
      %42 = vsyncadd [#allocation6], 0
      %s44 = sshll.u32 %s2, 4
      %s45 = int_to_ptr.hbm [resolvable:$true] %s44
      %s46 = sshll.u32 [#allocation7], 4
      %s47 = int_to_ptr.vmem [resolvable:$true] %s46
      %49 = dma.hbm_to_vmem [thread:$0]  %s45, 64, %s47, [#allocation6]
    $region13: #{tpu_custom_call.1} parent=1 // pred_fallthru
      _
    // Predicated region
    $region14: #{tpu_custom_call.1} parent=1 // pred_check
      _
    $region15: #{tpu_custom_call.1} parent=1 // pred_check_branch
      %51 = sbr.rel (0) target = $region17
    $region16: #{tpu_custom_call.1} parent=1 // pred_region
      _
    $region17: #{tpu_custom_call.1} parent=1 // pred_fallthru
      _
    // Predicated region
    $region18: #{tpu_custom_call.1} parent=1 // pred_check
      _
    $region19: #{tpu_custom_call.1} parent=1 // pred_check_branch
      %53 = sbr.rel (0) target = $region21
    $region20: #{tpu_custom_call.1} parent=1 // pred_region
      %55 = vsyncadd [#allocation9], 0
      %s56 = sshll.u32 %s4, 4
      %s57 = int_to_ptr.hbm [resolvable:$true] %s56
      %s58 = sshll.u32 [#allocation8], 4
      %s59 = int_to_ptr.vmem [resolvable:$true] %s58
      %64 = dma.hbm_to_vmem [thread:$0]  %s57, 2048, %s59, [#allocation9], 256, 256, 16
    $region21: #{tpu_custom_call.1} parent=1 // pred_fallthru
      _
    // Predicated region
    $region22: #{tpu_custom_call.1} parent=1 // pred_check
      _
    $region23: #{tpu_custom_call.1} parent=1 // pred_check_branch
      %66 = sbr.rel (0) target = $region25
    $region24: #{tpu_custom_call.1} parent=1 // pred_region
      %68 = vsyncadd [#allocation9], 0
      %s69 = sshll.u32 %s5, 4
      %s70 = int_to_ptr.hbm [resolvable:$true] %s69
      %s71 = sshll.u32 [#allocation10], 4
      %s72 = int_to_ptr.vmem [resolvable:$true] %s71
      %77 = dma.hbm_to_vmem [thread:$0]  %s70, 2432, %s72, [#allocation9], 128, 128, 8
    $region25: #{tpu_custom_call.1} parent=1 // pred_fallthru
      _
    // Predicated region
    $region26: #{tpu_custom_call.1} parent=1 // pred_check
      _
    $region27: #{tpu_custom_call.1} parent=1 // pred_check_branch
      %79 = sbr.rel (0) target = $region29
    $region28: #{tpu_custom_call.1} parent=1 // pred_region
      %81 = dma.done [#allocation3], 512
    $region29: #{tpu_custom_call.1} parent=1 // pred_fallthru
      _
    // Predicated region
    $region30: #{tpu_custom_call.1} parent=1 // pred_check
      _
    $region31: #{tpu_custom_call.1} parent=1 // pred_check_branch
      %83 = sbr.rel (0) target = $region33
    $region32: #{tpu_custom_call.1} parent=1 // pred_region
      %85 = dma.done [#allocation6], 32
    $region33: #{tpu_custom_call.1} parent=1 // pred_fallthru
      _
    // Predicated region
    $region34: #{tpu_custom_call.1} parent=1 // pred_check
      _
    $region35: #{tpu_custom_call.1} parent=1 // pred_check_branch
      %87 = sbr.rel (0) target = $region37
    $region36: #{tpu_custom_call.1} parent=1 // pred_region
      %89 = dma.done [#allocation6], 64
    $region37: #{tpu_custom_call.1} parent=1 // pred_fallthru
      _
    // Predicated region
    $region38: #{tpu_custom_call.1} parent=1 // pred_check
      _
    $region39: #{tpu_custom_call.1} parent=1 // pred_check_branch
      %91 = sbr.rel (0) target = $region41
    $region40: #{tpu_custom_call.1} parent=1 // pred_region
      %93 = dma.done [#allocation9], 2048
    $region41: #{tpu_custom_call.1} parent=1 // pred_fallthru
      _
    // Predicated region
    $region42: #{tpu_custom_call.1} parent=1 // pred_check
      _
    $region43: #{tpu_custom_call.1} parent=1 // pred_check_branch
      %95 = sbr.rel (0) target = $region45
    $region44: #{tpu_custom_call.1} parent=1 // pred_region
      %97 = dma.done [#allocation9], 2432
    $region45: #{tpu_custom_call.1} parent=1 // pred_fallthru
      _
    %v98 = vld [vmem:[#allocation2] sm:$0xff]
    %v99 = vld [vmem:[#allocation2 + $0x8] sm:$0xff]
    %v100 = vld [vmem:[#allocation2 + $0x10] sm:$0xff]
    %v101 = vld [vmem:[#allocation2 + $0x18] sm:$0xff]
    %v102 = vld [vmem:[#allocation7] sm:$0x1]
    %v103 = vperm.slane %v102, 0
    %v104 = vmul.f32 %v98, %v103
    %v105 = vmul.f32 %v99, %v103
    %v106 = vmul.f32 %v100, %v103
    %v107 = vmul.f32 %v101, %v103
    %v108 = vld [vmem:[#allocation7 + $0x1] sm:$0x1]
    %v109 = vperm.slane %v108, 0
    %v110 = vmul.f32 %v98, %v109
    %v111 = vmul.f32 %v99, %v109
    %v112 = vmul.f32 %v100, %v109
    %v113 = vmul.f32 %v101, %v109
    %vm118 = vcmask 1046528
    %v119 = vrot.slane %v110, 1
    %v120 = vrot.slane %v111, 1
    %v121 = vsel %vm118, %v119, %v120
    %v122 = vrot.slane %v112, 1
    %v123 = vrot.slane %v113, 1
    %v124 = vsel %vm118, %v122, %v123
    %v129 = vadd.f32 %v104, %v121
    %v130 = vadd.f32 %v105, %v120
    %v131 = vadd.f32 %v106, %v124
    %v132 = vadd.f32 %v107, %v123
    %v133 = vld [vmem:[#allocation7 + $0x2] sm:$0x1]
    %v134 = vperm.slane %v133, 0
    %v135 = vmul.f32 %v98, %v134
    %v136 = vmul.f32 %v99, %v134
    %v137 = vmul.f32 %v100, %v134
    %v138 = vmul.f32 %v101, %v134
    %vm143 = vcmask 1045504
    %v144 = vrot.slane %v135, 2
    %v145 = vrot.slane %v136, 2
    %v146 = vsel %vm143, %v144, %v145
    %v147 = vrot.slane %v137, 2
    %v148 = vrot.slane %v138, 2
    %v149 = vsel %vm143, %v147, %v148
    %v154 = vadd.f32 %v129, %v146
    %v155 = vadd.f32 %v130, %v145
    %v156 = vadd.f32 %v131, %v149
    %v157 = vadd.f32 %v132, %v148
    %v158 = vld [vmem:[#allocation7 + $0x3] sm:$0x1]
    %v159 = vperm.slane %v158, 0
    %v160 = vadd.f32 %v154, %v159
    %v161 = vadd.f32 %v155, %v159
    %v162 = vadd.f32 %v156, %v159
    %v163 = vadd.f32 %v157, %v159
    %v164 = vmax.f32 %v160, 0.0
    %v165 = vmax.f32 %v161, 0.0
    %v166 = vmax.f32 %v162, 0.0
    %v167 = vmax.f32 %v163, 0.0
    %vm168 = vcmask 130048
    %v169 = vsel %vm168, %v164, 0.0
    %vm170 = vcmask 128000
    %v171 = vsel %vm170, %v165, 0.0
    %v172 = vadd.f32 %v169, %v171
    %v173 = vrot.slane %v172, 4
    %v174 = vadd.f32 %v172, %v173
    %v175 = vrot.slane %v174, 2
    %v176 = vadd.f32 %v174, %v175
    %v177 = vrot.slane %v176, 1
    %v178 = vadd.f32 %v176, %v177
    %v179 = vsel %vm168, %v166, 0.0
    %v180 = vsel %vm170, %v167, 0.0
    %v181 = vadd.f32 %v179, %v180
    %v182 = vrot.slane %v181, 4
    %v183 = vadd.f32 %v181, %v182
    %v184 = vrot.slane %v183, 2
    %v185 = vadd.f32 %v183, %v184
    %v186 = vrot.slane %v185, 1
    %v187 = vadd.f32 %v185, %v186
    %v188 = vmul.f32 %v178, 0.071428575
    %v189 = vmul.f32 %v187, 0.071428575
    %v190 = vld [vmem:[#allocation5] sm:$0x3]
    %vm193 = vcmask 1041409
    %v194 = vsel %vm193, %v189, %v188
    %197 = vrot.lane.b32.xlu0 %v190, 16
    %v198 = vpop.permute.xlu0 %197
    %v200 = vsel %vm168, %v194, %v198
    %202 = vrot.lane.b32.xlu0 %v200, 19
    %v203 = vpop.permute.xlu0 %202
    %205 = vrot.lane.b32.xlu0 %v200, 38
    %v206 = vpop.permute.xlu0 %205
    %vm208 = vcmask 154624
    %v209 = vsel %vm208, %v200, %v203
    %vm210 = vcmask 310272
    %v211 = vsel %vm210, %v209, %v206
    %v212 = vld [vmem:[%s3] sm:$0x1]
    %v213 = vperm.slane %v212, 0
    %v214 = vmul.f32 %v211, %v213
    %v215 = vld [vmem:[%s3 + $0x1] sm:$0x1]
    %v216 = vperm.slane %v215, 0
    %v217 = vadd.f32 %v214, %v216
    %v218 = vmax.f32 %v217, 0.0
    %v219 = vld [vmem:[#allocation8] sm:$0xff]
    %v220 = vld [vmem:[#allocation8 + $0x8] sm:$0xff]
    %v221 = vld [vmem:[#allocation8 + $0x10] sm:$0xff]
    %v222 = vld [vmem:[#allocation8 + $0x18] sm:$0xff]
    %v223 = vld [vmem:[#allocation8 + $0x20] sm:$0xff]
    %v224 = vld [vmem:[#allocation8 + $0x28] sm:$0xff]
    %v225 = vld [vmem:[#allocation8 + $0x30] sm:$0xff]
    %v226 = vld [vmem:[#allocation8 + $0x38] sm:$0xff]
    %v227 = vld [vmem:[#allocation8 + $0x40] sm:$0xff]
    %v228 = vld [vmem:[#allocation8 + $0x48] sm:$0xff]
    %v229 = vld [vmem:[#allocation8 + $0x50] sm:$0xff]
    %v230 = vld [vmem:[#allocation8 + $0x58] sm:$0xff]
    %v231 = vld [vmem:[#allocation8 + $0x60] sm:$0xff]
    %v232 = vld [vmem:[#allocation8 + $0x68] sm:$0xff]
    %v233 = vld [vmem:[#allocation8 + $0x70] sm:$0x1]
    %v234 = vld [vmem:[#allocation8 + $0x78] sm:$0x1]
    %s235 = scalar_lea.vmem [#allocation8], 113
    %v236 = vld [vmem:[%s235] ss:$8 sm:$0x3]
    %v238 = vperm.slane %v236, 0
    %v239 = vperm.slane %v236, 1
    %vm242 = vcmask 465920
    %v244 = vsel %vm242, %v218, 0
    %vm246 = vcmask 1040384
    %v248 = vsel %vm246, %v233, 0
    %v251 = vsel %vm246, %v234, 0
    %253 = vmatpush.msra.mxu0 0.0
    %254 = vmatpush.msra.mxu0 0.0
    %255 = vmatpush.msra.mxu0 0.0
    %256 = vmatpush.msra.mxu0 0.0
    %257 = vmatpush.msra.mxu0 0.0
    %258 = vmatpush.msra.mxu0 0.0
    %259 = vmatpush.msra.mxu0 0.0
    %260 = vmatpush.msra.mxu0 0.0
    %261 = vmatpush.msra.mxu0 %v248
    %262 = vmatpush.msra.mxu0 %v231
    %263 = vmatpush.msra.mxu0 %v229
    %264 = vmatpush.msra.mxu0 %v227
    %265 = vmatpush.msra.mxu0 %v225
    %266 = vmatpush.msra.mxu0 %v223
    %267 = vmatpush.msra.mxu0 %v221
    %268 = vmatpush.msra.mxu0 %v219
    %269 = vmatmul.f32.gmra.mxu0 %v244
    %v270 = vpop.f32.mrf.mxu0
    %v271 = vadd.f32 %v238, %v270
    %272 = vdwg.mxu0
    %273 = vmatpush.msra.mxu0 0.0
    %274 = vmatpush.msra.mxu0 0.0
    %275 = vmatpush.msra.mxu0 0.0
    %276 = vmatpush.msra.mxu0 0.0
    %277 = vmatpush.msra.mxu0 0.0
    %278 = vmatpush.msra.mxu0 0.0
    %279 = vmatpush.msra.mxu0 0.0
    %280 = vmatpush.msra.mxu0 0.0
    %281 = vmatpush.msra.mxu0 %v251
    %282 = vmatpush.msra.mxu0 %v232
    %283 = vmatpush.msra.mxu0 %v230
    %284 = vmatpush.msra.mxu0 %v228
    %285 = vmatpush.msra.mxu0 %v226
    %286 = vmatpush.msra.mxu0 %v224
    %287 = vmatpush.msra.mxu0 %v222
    %288 = vmatpush.msra.mxu0 %v220
    %289 = vmatmul.f32.gmra.mxu0 %v244
    %v290 = vpop.f32.mrf.mxu0
    %v291 = vadd.f32 %v239, %v290
    %292 = vdwg.mxu0
    %v293 = vmax.f32 %v271, 0.0
    %v294 = vmax.f32 %v291, 0.0
    %v295 = vld [vmem:[#allocation10] sm:$0xff]
    %v296 = vld [vmem:[#allocation10 + $0x8] sm:$0xff]
    %v297 = vld [vmem:[#allocation10 + $0x10] sm:$0xff]
    %v298 = vld [vmem:[#allocation10 + $0x18] sm:$0xff]
    %v299 = vld [vmem:[#allocation10 + $0x20] sm:$0xff]
    %v300 = vld [vmem:[#allocation10 + $0x28] sm:$0xff]
    %v301 = vld [vmem:[#allocation10 + $0x30] sm:$0xff]
    %v302 = vld [vmem:[#allocation10 + $0x38] sm:$0xff]
    %v303 = vld [vmem:[#allocation10 + $0x40] sm:$0xff]
    %v304 = vld [vmem:[#allocation10 + $0x48] sm:$0xff]
    %v305 = vld [vmem:[#allocation10 + $0x50] sm:$0xff]
    %v306 = vld [vmem:[#allocation10 + $0x58] sm:$0xff]
    %v307 = vld [vmem:[#allocation10 + $0x60] sm:$0xff]
    %v308 = vld [vmem:[#allocation10 + $0x68] sm:$0xff]
    %v309 = vld [vmem:[#allocation10 + $0x70] sm:$0xff]
    %v310 = vld [vmem:[#allocation10 + $0x78] sm:$0xff]
    %v311 = vld [vmem:[#allocation10 + $0x80] sm:$0xff]
    %v312 = vld [vmem:[#allocation10 + $0x88] sm:$0xff]
    %v313 = vld [vmem:[#allocation10 + $0x90] sm:$0x3f]
    %v314 = vld [vmem:[#allocation10 + $0x96] sm:$0x1]
    %v315 = vperm.slane %v314, 0
    %vm316 = vcmask 179200
    %v318 = vsel %vm316, %v294, 0
    %v321 = vsel %vm143, %v313, 0
    %323 = vmatpush.msra.mxu0 %v310
    %324 = vmatpush.msra.mxu0 %v309
    %325 = vmatpush.msra.mxu0 %v308
    %326 = vmatpush.msra.mxu0 %v307
    %327 = vmatpush.msra.mxu0 %v306
    %328 = vmatpush.msra.mxu0 %v305
    %329 = vmatpush.msra.mxu0 %v304
    %330 = vmatpush.msra.mxu0 %v303
    %331 = vmatpush.msra.mxu0 %v302
    %332 = vmatpush.msra.mxu0 %v301
    %333 = vmatpush.msra.mxu0 %v300
    %334 = vmatpush.msra.mxu0 %v299
    %335 = vmatpush.msra.mxu0 %v298
    %336 = vmatpush.msra.mxu0 %v297
    %337 = vmatpush.msra.mxu0 %v296
    %338 = vmatpush.msra.mxu0 %v295
    %339 = vmatmul.f32.gmra.mxu0 %v293
    %v340 = vpop.f32.mrf.mxu0
    %v341 = vadd.f32 %v315, %v340
    %342 = vdwg.mxu0
    %343 = vmatpush.msra.mxu0 0.0
    %344 = vmatpush.msra.mxu0 0.0
    %345 = vmatpush.msra.mxu0 0.0
    %346 = vmatpush.msra.mxu0 0.0
    %347 = vmatpush.msra.mxu0 0.0
    %348 = vmatpush.msra.mxu0 0.0
    %349 = vmatpush.msra.mxu0 0.0
    %350 = vmatpush.msra.mxu0 0.0
    %351 = vmatpush.msra.mxu0 0.0
    %352 = vmatpush.msra.mxu0 0.0
    %353 = vmatpush.msra.mxu0 0.0
    %354 = vmatpush.msra.mxu0 0.0
    %355 = vmatpush.msra.mxu0 0.0
    %356 = vmatpush.msra.mxu0 %v321
    %357 = vmatpush.msra.mxu0 %v312
    %358 = vmatpush.msra.mxu0 %v311
    %359 = vmatmul.f32.gmra.mxu0 %v318
    %v360 = vpop.f32.mrf.mxu0
    %v361 = vadd.f32 %v341, %v360
    %362 = vdwg.mxu0
    %v363 = vmax.f32 %v361, 0.0
    %364 = vst [vmem:[#allocation11] sm:$0x3] %v363
    // Predicated region
    $region46: #{tpu_custom_call.1} parent=1 // pred_check
      _
    $region47: #{tpu_custom_call.1} parent=1 // pred_check_branch
      %366 = sbr.rel (0) target = $region49
    $region48: #{tpu_custom_call.1} parent=1 // pred_region
      %368 = vsyncadd [#allocation4], 0
      %s370 = sshll.u32 [#allocation11], 4
      %s371 = int_to_ptr.vmem [resolvable:$true] %s370
      %s372 = sshll.u32 %s6, 4
      %s373 = int_to_ptr.hbm [resolvable:$true] %s372
      %375 = dma.vmem_to_hbm [thread:$0]  %s371, 32, %s373, [#allocation4]
    $region49: #{tpu_custom_call.1} parent=1 // pred_fallthru
      _
    // Predicated region
    $region50: #{tpu_custom_call.1} parent=1 // pred_check
      _
    $region51: #{tpu_custom_call.1} parent=1 // pred_check_branch
      %377 = sbr.rel (0) target = $region53
    $region52: #{tpu_custom_call.1} parent=1 // pred_region
      %379 = dma.done [#allocation4], 32
    $region53: #{tpu_custom_call.1} parent=1 // pred_fallthru
      _
    %380 = vsyncpa [#allocation3], 1
    %381 = vsyncpa [#allocation6], 1
    %382 = vsyncpa [#allocation9], 1
    %383 = vsyncpa [#allocation4], 1

</llo_original>
